<compile_context>
chip_gen: v5e
topology: v5e:2x2
jax: 0.10.0
libtpu: 0.0.40
codegen_flags: <defaults>
</compile_context>

<pallas_src>
import jax
import jax.numpy as jnp
from jax.experimental import pallas as pl
from jax.experimental.pallas import tpu as pltpu

_LANE = 128


def latentz_kernel(x_ref, w_ref, b_ref, eps_ref, z_ref, mu_ref, lv_ref):
    # x_ref: (tb, H); w_ref: (H, 2*Lp); b_ref: (1, 2*Lp); eps_ref: (tb, Lp)
    # z/mu/lv refs: (tb, Lp). Fused projection columns [0:Lp) = mu head,
    # [Lp:2*Lp) = logvar head (both zero-padded beyond the true L).
    lp = mu_ref.shape[-1]
    x = x_ref[...]
    proj = jnp.dot(x, w_ref[...], preferred_element_type=jnp.float32) + b_ref[...]
    mu = proj[:, :lp]                 # static slice on a 128-lane boundary
    lv = proj[:, lp:]
    std = jnp.exp(lv * 0.5)           # logvar.mul(0.5).exp_()  (EUP exp)
    z = eps_ref[...] * std + mu       # eps.mul(std) + mu        (VPU)
    z_ref[...] = z.astype(z_ref.dtype)
    mu_ref[...] = mu.astype(mu_ref.dtype)
    lv_ref[...] = lv.astype(lv_ref.dtype)


def _pick_tb(b, target=512):
    """Largest divisor of b <= target, preferring multiples of 8 (sublanes)."""
    if b <= target:
        return b
    best = None
    for t in range(target, 0, -1):
        if b % t == 0:
            if best is None:
                best = t
            if t % 8 == 0:
                return t
    return best if best is not None else b


def latent_z(x, w_mu, b_mu, w_lv, b_lv, eps, *, tb=None):
    """Pallas implementation of LatentZ.forward.

    x:     (B, H) float32
    w_mu:  (H, L) float32   (transpose of PyTorch nn.Linear weight)
    b_mu:  (L,)   float32
    w_lv:  (H, L) float32
    b_lv:  (L,)   float32
    eps:   (B, L) float32   standard-normal noise (reparameterization)
    returns (z, mu, logvar), each (B, L) float32
    """
    B, H = x.shape
    L = w_mu.shape[1]
    Lp = max(_LANE, ((L + _LANE - 1) // _LANE) * _LANE)   # lane-dense latent dim
    pad = Lp - L

    f32 = jnp.float32
    # Fused, zero-padded weight (H, 2*Lp): cols [0:L) = w_mu, [Lp:Lp+L) = w_lv.
    w_cat = jnp.concatenate(
        [jnp.pad(w_mu.astype(f32), ((0, 0), (0, pad))),
         jnp.pad(w_lv.astype(f32), ((0, 0), (0, pad)))], axis=1)
    b_cat = jnp.concatenate(
        [jnp.pad(b_mu.astype(f32), (0, pad)),
         jnp.pad(b_lv.astype(f32), (0, pad))])[None, :]
    eps_p = jnp.pad(eps.astype(f32), ((0, 0), (0, pad)))

    if tb is None:
        tb = _pick_tb(B)
    assert B % tb == 0, f"batch {B} must be divisible by tile {tb}"
    grid = (B // tb,)

    out_sd = jax.ShapeDtypeStruct((B, Lp), f32)

    # VMEM budget: resident fused weights/bias (worst case double-buffered)
    # plus double-buffered x/eps/output tiles, with 2x headroom; floor keeps
    # the compiler's internal scratch comfortable, cap stays under the v7x
    # 64 MiB physical VMEM.
    wbytes = (H * 2 * Lp + 2 * Lp) * 4 * 2
    tbytes = (tb * H + 4 * tb * Lp) * 4 * 2
    vmem_limit = int(min(48 * 2**20, max(32 * 2**20, 2 * (wbytes + tbytes))))

    z, mu, lv = pl.pallas_call(
        latentz_kernel,
        out_shape=(out_sd, out_sd, out_sd),
        grid_spec=pltpu.PrefetchScalarGridSpec(
            num_scalar_prefetch=0,
            grid=grid,
            in_specs=[
                pl.BlockSpec((tb, H), lambda i: (i, 0)),        # x tile
                pl.BlockSpec((H, 2 * Lp), lambda i: (0, 0)),    # fused weights (resident)
                pl.BlockSpec((1, 2 * Lp), lambda i: (0, 0)),    # fused bias  (resident)
                pl.BlockSpec((tb, Lp), lambda i: (i, 0)),       # eps tile
            ],
            out_specs=[
                pl.BlockSpec((tb, Lp), lambda i: (i, 0)),       # z
                pl.BlockSpec((tb, Lp), lambda i: (i, 0)),       # mu
                pl.BlockSpec((tb, Lp), lambda i: (i, 0)),       # logvar
            ],
        ),
        compiler_params=pltpu.CompilerParams(
            dimension_semantics=("parallel",),
            vmem_limit_bytes=vmem_limit,
        ),
    )(x.astype(f32), w_cat, b_cat, eps_p)

    # TODO(synk): for very large H*Lp (fused weights exceeding VMEM, esp. v7x
    # 64 MiB), add a K(H) reduction grid axis with an f32 accumulator scratch.
    # TODO(synk): optionally generate eps in-kernel (pltpu.prng_seed +
    # pltpu.stateful_normal) to drop the eps HBM read; kept as an explicit
    # input here so the forward stays deterministic and reference-checkable.
    if pad == 0:
        return z, mu, lv
    return z[:, :L], mu[:, :L], lv[:, :L]


if __name__ == "__main__":
    key = jax.random.PRNGKey(0)
    B, H, L = 16, 32, 16   # batch, hidden_size, latent_size (small test shapes)

    k_x, k_wm, k_bm, k_wl, k_bl, k_eps = jax.random.split(key, 6)
    bound = 1.0 / jnp.sqrt(H)  # mimic nn.Linear default init range
    x = jax.random.normal(k_x, (B, H), dtype=jnp.float32)
    w_mu = jax.random.uniform(k_wm, (H, L), minval=-bound, maxval=bound,
                              dtype=jnp.float32)
    b_mu = jax.random.uniform(k_bm, (L,), minval=-bound, maxval=bound,
                              dtype=jnp.float32)
    w_lv = jax.random.uniform(k_wl, (H, L), minval=-bound, maxval=bound,
                              dtype=jnp.float32)
    b_lv = jax.random.uniform(k_bl, (L,), minval=-bound, maxval=bound,
                              dtype=jnp.float32)
    # eps ~ N(0,1): the PyTorch module draws fresh normal noise each forward;
    # here it is drawn deterministically from PRNGKey(0) and fed to the kernel.
    eps = jax.random.normal(k_eps, (B, L), dtype=jnp.float32)

    # tb=8 -> 2-step grid: exercises the pipelined multi-tile path.
    z, mu, lv = latent_z(x, w_mu, b_mu, w_lv, b_lv, eps, tb=8)
    jax.block_until_ready((z, mu, lv))

    # reference check in plain JAX
    mu_ref = x @ w_mu + b_mu
    lv_ref = x @ w_lv + b_lv
    z_ref = eps * jnp.exp(0.5 * lv_ref) + mu_ref
    assert jnp.allclose(mu, mu_ref, atol=1e-5)
    assert jnp.allclose(lv, lv_ref, atol=1e-5)
    assert jnp.allclose(z, z_ref, atol=1e-5)

    print("KERNEL_OK")
</pallas_src>

<mosaic_0001>
module attributes {stable_mosaic.version = 11 : i64} {
  func.func @latentz_kernel(%arg0: i32, %arg1: memref<8x32xf32, #tpu.memory_space<vmem>>, %arg2: memref<32x256xf32, #tpu.memory_space<vmem>>, %arg3: memref<1x256xf32, #tpu.memory_space<vmem>>, %arg4: memref<8x128xf32, #tpu.memory_space<vmem>>, %arg5: memref<8x128xf32, #tpu.memory_space<vmem>>, %arg6: memref<8x128xf32, #tpu.memory_space<vmem>>, %arg7: memref<8x128xf32, #tpu.memory_space<vmem>>) attributes {dimension_semantics = [#tpu.dimension_semantics<parallel>], iteration_bounds = array<i64: 2>, scalar_prefetch = 0 : i64, scratch_operands = 0 : i64, tpu.core_type = #tpu.core_type<tc>, window_params = [{transform_indices = @transform_0, window_bounds = array<i64: 8, 32>}, {pipeline_mode = #tpu.pipeline_mode<synchronous>, transform_indices = @transform_1, window_bounds = array<i64: 32, 256>}, {pipeline_mode = #tpu.pipeline_mode<synchronous>, transform_indices = @transform_2, window_bounds = array<i64: 1, 256>}, {transform_indices = @transform_3, window_bounds = array<i64: 8, 128>}, {transform_indices = @transform_4, window_bounds = array<i64: 8, 128>}, {transform_indices = @transform_5, window_bounds = array<i64: 8, 128>}, {transform_indices = @transform_6, window_bounds = array<i64: 8, 128>}]} {
    %c0 = arith.constant 0 : index
    %c0_0 = arith.constant 0 : index
    %0 = vector.load %arg1[%c0, %c0_0] : memref<8x32xf32, #tpu.memory_space<vmem>>, vector<8x32xf32>
    %c0_1 = arith.constant 0 : index
    %c0_2 = arith.constant 0 : index
    %1 = vector.load %arg2[%c0_1, %c0_2] : memref<32x256xf32, #tpu.memory_space<vmem>>, vector<32x256xf32>
    %cst = arith.constant dense<0.000000e+00> : vector<8x256xf32>
    %2 = tpu.matmul %0, %1, %cst {dimension_numbers = #tpu.dot_dimension_numbers<[1], [0], [0], [1], [0, 0, 1, 1], [], []>} : vector<8x32xf32>, vector<32x256xf32>, vector<8x256xf32> -> vector<8x256xf32>
    %c0_3 = arith.constant 0 : index
    %c0_4 = arith.constant 0 : index
    %3 = vector.load %arg3[%c0_3, %c0_4] : memref<1x256xf32, #tpu.memory_space<vmem>>, vector<1x256xf32>
    %4 = vector.broadcast %3 : vector<1x256xf32> to vector<8x256xf32>
    %5 = arith.addf %2, %4 : vector<8x256xf32>
    %6 = vector.extract_strided_slice %5 {offsets = [0, 0], sizes = [8, 128], strides = [1, 1]} : vector<8x256xf32> to vector<8x128xf32>
    %7 = vector.extract_strided_slice %5 {offsets = [0, 128], sizes = [8, 128], strides = [1, 1]} : vector<8x256xf32> to vector<8x128xf32>
    %cst_5 = arith.constant 5.000000e-01 : f32
    %8 = vector.broadcast %cst_5 : f32 to vector<8x128xf32>
    %9 = arith.mulf %7, %8 : vector<8x128xf32>
    %10 = math.exp %9 : vector<8x128xf32>
    %c0_6 = arith.constant 0 : index
    %c0_7 = arith.constant 0 : index
    %11 = vector.load %arg4[%c0_6, %c0_7] : memref<8x128xf32, #tpu.memory_space<vmem>>, vector<8x128xf32>
    %12 = arith.mulf %11, %10 : vector<8x128xf32>
    %13 = arith.addf %12, %6 : vector<8x128xf32>
    %c0_8 = arith.constant 0 : index
    %c0_9 = arith.constant 0 : index
    %14 = vector.load %arg5[%c0_8, %c0_9] : memref<8x128xf32, #tpu.memory_space<vmem>>, vector<8x128xf32>
    tpu.vector_store %arg5[%c0_8, %c0_9], %13 {strides = array<i32>} : memref<8x128xf32, #tpu.memory_space<vmem>>, vector<8x128xf32>,
    %c0_10 = arith.constant 0 : index
    %c0_11 = arith.constant 0 : index
    %15 = vector.load %arg6[%c0_10, %c0_11] : memref<8x128xf32, #tpu.memory_space<vmem>>, vector<8x128xf32>
    tpu.vector_store %arg6[%c0_10, %c0_11], %6 {strides = array<i32>} : memref<8x128xf32, #tpu.memory_space<vmem>>, vector<8x128xf32>,
    %c0_12 = arith.constant 0 : index
    %c0_13 = arith.constant 0 : index
    %16 = vector.load %arg7[%c0_12, %c0_13] : memref<8x128xf32, #tpu.memory_space<vmem>>, vector<8x128xf32>
    tpu.vector_store %arg7[%c0_12, %c0_13], %7 {strides = array<i32>} : memref<8x128xf32, #tpu.memory_space<vmem>>, vector<8x128xf32>,
    return
  }
  func.func @transform_0(%arg0: i32) -> (i32, i32) {
    %c0_i32 = arith.constant 0 : i32
    %c0_i32_0 = arith.constant 0 : i32
    return %arg0, %c0_i32 : i32, i32
  }
  func.func @transform_1(%arg0: i32) -> (i32, i32) {
    %c0_i32 = arith.constant 0 : i32
    %c0_i32_0 = arith.constant 0 : i32
    %c0_i32_1 = arith.constant 0 : i32
    return %c0_i32, %c0_i32_0 : i32, i32
  }
  func.func @transform_2(%arg0: i32) -> (i32, i32) {
    %c0_i32 = arith.constant 0 : i32
    %c0_i32_0 = arith.constant 0 : i32
    %c0_i32_1 = arith.constant 0 : i32
    return %c0_i32, %c0_i32_0 : i32, i32
  }
  func.func @transform_3(%arg0: i32) -> (i32, i32) {
    %c0_i32 = arith.constant 0 : i32
    %c0_i32_0 = arith.constant 0 : i32
    return %arg0, %c0_i32 : i32, i32
  }
  func.func @transform_4(%arg0: i32) -> (i32, i32) {
    %c0_i32 = arith.constant 0 : i32
    %c0_i32_0 = arith.constant 0 : i32
    return %arg0, %c0_i32 : i32, i32
  }
  func.func @transform_5(%arg0: i32) -> (i32, i32) {
    %c0_i32 = arith.constant 0 : i32
    %c0_i32_0 = arith.constant 0 : i32
    return %arg0, %c0_i32 : i32, i32
  }
  func.func @transform_6(%arg0: i32) -> (i32, i32) {
    %c0_i32 = arith.constant 0 : i32
    %c0_i32_0 = arith.constant 0 : i32
    return %arg0, %c0_i32 : i32, i32
  }
}

</mosaic_0001>

<llo_original>
// kernel: tpu_custom_call.1
$region0: #{tpu_custom_call.1}
  #allocation0 [shape = 'u32[]', space=smem, size = 0x4, offset = 0x4, fixed_abs, tag = 'smem constant byte address 0x4 - core index']
  #allocation1 [shape = 'u32[72,128]{1,0:T(1,128)}', space=vmem, size = 0x9000, scoped, tag = 'internal scratch']
  %s0 = inlined_call_operand.hbm [shape: f32[16,32], index: 0, kind: input, shape index: {}]
  %s1 = inlined_call_operand.hbm [shape: f32[32,256], index: 1, kind: input, shape index: {}]
  %s2 = inlined_call_operand.hbm [shape: f32[1,256], index: 2, kind: input, shape index: {}]
  %s3 = inlined_call_operand.hbm [shape: f32[16,128], index: 3, kind: input, shape index: {}]
  %s4 = inlined_call_operand.hbm [shape: f32[16,128], index: 4, kind: output, shape index: {0}]
  %s5 = inlined_call_operand.hbm [shape: f32[16,128], index: 5, kind: output, shape index: {1}]
  %s6 = inlined_call_operand.hbm [shape: f32[16,128], index: 6, kind: output, shape index: {2}]
  %7 = xla_tuple %s4, %s5, %s6
  %s8 = sld [smem:[#allocation0]]
  $region81: #{tpu_custom_call.1} parent=0
    _
  %s10 = ssub.s32 1, %s8
  %s11 = scalar_select 0, %s10, %s8
  $region1: #{tpu_custom_call.1} parent=0
    #allocation2 [shape = 'u8[8192]{0}', space=vmem, size = 0x2000, scoped, tag = 'input window, operand 0']
    #allocation3 [shape = 's32[2]{0}', space=sflag, size = 0x8, scoped, tag = 'scoped memory for tpu_custom_call.1']
    #allocation4 [shape = 's32[2]{0}', space=sflag, size = 0x8, scoped, tag = 'scoped memory for tpu_custom_call.1']
    #allocation5 [shape = 'u8[32768]{0}', space=vmem, size = 0x8000, scoped, tag = 'input window, operand 1, single buffered']
    #allocation6 [shape = 's32[1]{0}', space=sflag, size = 0x4, scoped, tag = 'scoped memory for tpu_custom_call.1']
    #allocation7 [shape = 'u8[1024]{0}', space=vmem, size = 0x400, scoped, tag = 'input window, operand 2, single buffered']
    #allocation8 [shape = 'u8[8192]{0}', space=vmem, size = 0x2000, scoped, tag = 'input window, operand 3']
    #allocation9 [shape = 's32[2]{0}', space=sflag, size = 0x8, scoped, tag = 'scoped memory for tpu_custom_call.1']
    #allocation10 [shape = 'u8[8192]{0}', space=vmem, size = 0x2000, scoped, tag = 'output window, operand 0']
    #allocation11 [shape = 'u8[8192]{0}', space=vmem, size = 0x2000, scoped, tag = 'output window, operand 1']
    #allocation12 [shape = 's32[2]{0}', space=sflag, size = 0x8, scoped, tag = 'scoped memory for tpu_custom_call.1']
    #allocation13 [shape = 'u8[8192]{0}', space=vmem, size = 0x2000, scoped, tag = 'output window, operand 2']
    %12 = vsyncpa [#allocation3], 0
    %s13 = scalar_lea.sflag [#allocation3], 1
    %14 = vsyncpa %s13, 0
    %15 = vsyncpa [#allocation6], 0
    %16 = vsyncpa [#allocation9], 0
    %s17 = scalar_lea.sflag [#allocation9], 1
    %18 = vsyncpa %s17, 0
    %19 = vsyncpa [#allocation4], 0
    %s20 = scalar_lea.sflag [#allocation4], 1
    %21 = vsyncpa %s20, 0
    %22 = vsyncpa [#allocation12], 0
    %s23 = scalar_lea.sflag [#allocation12], 1
    %24 = vsyncpa %s23, 0
    loop: start=0, step=1, limit=4
    $region2: #{tpu_custom_call.1} parent=1 // loop_pre_header
      _
    $region3: #{tpu_custom_call.1} parent=1 // loop_header
      %s26 = sphi 0, %s30
      %p27 = scmp.ge.s32.totalorder %s26, 4
      %s36 = sphi 0, %s38
      %s39 = sphi 0, %s36
      %s40 = sphi 0, %s39
      %s56 = sphi 0, %s40
      %s60 = sphi 0, %s60
      %s62 = sphi 0, %s60
      %s63 = sphi 0, %s62
      %s77 = sphi 0, %s63
      %s81 = sphi 0, %s81
      %s83 = sphi 0, %s81
      %s84 = sphi 0, %s83
      %s98 = sphi 0, %s84
      %s104 = sphi 0, %s106
      %s107 = sphi 0, %s104
      %s108 = sphi 0, %s107
      %s124 = sphi 0, %s108
      %s130 = sphi 0, %s132
      %s133 = sphi 0, %s130
      %s134 = sphi 0, %s133
      %s150 = sphi 0, %s134
      %s156 = sphi 0, %s158
      %s159 = sphi 0, %s156
      %s160 = sphi 0, %s159
      %s176 = sphi 0, %s160
      %s182 = sphi 0, %s184
      %s185 = sphi 0, %s182
      %s186 = sphi 0, %s185
      %s202 = sphi 0, %s186
    $region4: #{tpu_custom_call.1} parent=1 // loop_header_branch
      %29 = sbr.rel (%p27) target = $region8
    $region5: #{tpu_custom_call.1} parent=1 // loop_body
      %s31 = ssub.s32 %s26, 1
      %s32 = ssub.s32 %s26, 2
      %s33 = sadd.s32 %s26, 1
      %s34 = ssub.s32 %s26, %s33
      %p35 = scmp.eq.s32.totalorder %s34, 0
      %s37 = sadd.s32 %s36, 1
      %s38 = scalar_select %p35, %s36, %s37
      %p41 = pneg %p35
      %p42 = scmp.eq.s32.totalorder %s26, 1
      %p43 = por %p41, %p42
      %p44 = scmp.ne.s32.totalorder %s36, %s39
      %p45 = scmp.eq.s32.totalorder %s26, 0
      %p46 = por %p44, %p45
      %p47 = scmp.ne.s32.totalorder %s36, %s39
      %p48 = scmp.eq.s32.totalorder %s31, 1
      %p49 = por %p47, %p48
      %p50 = scmp.ne.s32.totalorder %s39, %s40
      %p51 = scmp.eq.s32.totalorder %s31, 0
      %p52 = por %p50, %p51
      %p53 = scmp.ne.s32.totalorder %s39, %s40
      %p54 = scmp.eq.s32.totalorder %s32, 1
      %p55 = por %p53, %p54
      %p57 = scmp.ne.s32.totalorder %s40, %s56
      %p58 = scmp.eq.s32.totalorder %s32, 0
      %p59 = por %p57, %p58
      %s61 = sadd.s32 %s60, 1
      %p64 = scmp.eq.s32.totalorder %s26, 1
      %p65 = scmp.ne.s32.totalorder %s60, %s62
      %p66 = scmp.eq.s32.totalorder %s26, 0
      %p67 = por %p65, %p66
      %p68 = scmp.ne.s32.totalorder %s60, %s62
      %p69 = scmp.eq.s32.totalorder %s31, 1
      %p70 = por %p68, %p69
      %p71 = scmp.ne.s32.totalorder %s62, %s63
      %p72 = scmp.eq.s32.totalorder %s31, 0
      %p73 = por %p71, %p72
      %p74 = scmp.ne.s32.totalorder %s62, %s63
      %p75 = scmp.eq.s32.totalorder %s32, 1
      %p76 = por %p74, %p75
      %p78 = scmp.ne.s32.totalorder %s63, %s77
      %p79 = scmp.eq.s32.totalorder %s32, 0
      %p80 = por %p78, %p79
      %s82 = sadd.s32 %s81, 1
      %p85 = scmp.eq.s32.totalorder %s26, 1
      %p86 = scmp.ne.s32.totalorder %s81, %s83
      %p87 = scmp.eq.s32.totalorder %s26, 0
      %p88 = por %p86, %p87
      %p89 = scmp.ne.s32.totalorder %s81, %s83
      %p90 = scmp.eq.s32.totalorder %s31, 1
      %p91 = por %p89, %p90
      %p92 = scmp.ne.s32.totalorder %s83, %s84
      %p93 = scmp.eq.s32.totalorder %s31, 0
      %p94 = por %p92, %p93
      %p95 = scmp.ne.s32.totalorder %s83, %s84
      %p96 = scmp.eq.s32.totalorder %s32, 1
      %p97 = por %p95, %p96
      %p99 = scmp.ne.s32.totalorder %s84, %s98
      %p100 = scmp.eq.s32.totalorder %s32, 0
      %p101 = por %p99, %p100
      %s102 = ssub.s32 %s26, %s33
      %p103 = scmp.eq.s32.totalorder %s102, 0
      %s105 = sadd.s32 %s104, 1
      %s106 = scalar_select %p103, %s104, %s105
      %p109 = pneg %p103
      %p110 = scmp.eq.s32.totalorder %s26, 1
      %p111 = por %p109, %p110
      %p112 = scmp.ne.s32.totalorder %s104, %s107
      %p113 = scmp.eq.s32.totalorder %s26, 0
      %p114 = por %p112, %p113
      %p115 = scmp.ne.s32.totalorder %s104, %s107
      %p116 = scmp.eq.s32.totalorder %s31, 1
      %p117 = por %p115, %p116
      %p118 = scmp.ne.s32.totalorder %s107, %s108
      %p119 = scmp.eq.s32.totalorder %s31, 0
      %p120 = por %p118, %p119
      %p121 = scmp.ne.s32.totalorder %s107, %s108
      %p122 = scmp.eq.s32.totalorder %s32, 1
      %p123 = por %p121, %p122
      %p125 = scmp.ne.s32.totalorder %s108, %s124
      %p126 = scmp.eq.s32.totalorder %s32, 0
      %p127 = por %p125, %p126
      %s128 = ssub.s32 %s26, %s33
      %p129 = scmp.eq.s32.totalorder %s128, 0
      %s131 = sadd.s32 %s130, 1
      %s132 = scalar_select %p129, %s130, %s131
      %p135 = pneg %p129
      %p136 = scmp.eq.s32.totalorder %s26, 1
      %p137 = por %p135, %p136
      %p138 = scmp.ne.s32.totalorder %s130, %s133
      %p139 = scmp.eq.s32.totalorder %s26, 0
      %p140 = por %p138, %p139
      %p141 = scmp.ne.s32.totalorder %s130, %s133
      %p142 = scmp.eq.s32.totalorder %s31, 1
      %p143 = por %p141, %p142
      %p144 = scmp.ne.s32.totalorder %s133, %s134
      %p145 = scmp.eq.s32.totalorder %s31, 0
      %p146 = por %p144, %p145
      %p147 = scmp.ne.s32.totalorder %s133, %s134
      %p148 = scmp.eq.s32.totalorder %s32, 1
      %p149 = por %p147, %p148
      %p151 = scmp.ne.s32.totalorder %s134, %s150
      %p152 = scmp.eq.s32.totalorder %s32, 0
      %p153 = por %p151, %p152
      %s154 = ssub.s32 %s26, %s33
      %p155 = scmp.eq.s32.totalorder %s154, 0
      %s157 = sadd.s32 %s156, 1
      %s158 = scalar_select %p155, %s156, %s157
      %p161 = pneg %p155
      %p162 = scmp.eq.s32.totalorder %s26, 1
      %p163 = por %p161, %p162
      %p164 = scmp.ne.s32.totalorder %s156, %s159
      %p165 = scmp.eq.s32.totalorder %s26, 0
      %p166 = por %p164, %p165
      %p167 = scmp.ne.s32.totalorder %s156, %s159
      %p168 = scmp.eq.s32.totalorder %s31, 1
      %p169 = por %p167, %p168
      %p170 = scmp.ne.s32.totalorder %s159, %s160
      %p171 = scmp.eq.s32.totalorder %s31, 0
      %p172 = por %p170, %p171
      %p173 = scmp.ne.s32.totalorder %s159, %s160
      %p174 = scmp.eq.s32.totalorder %s32, 1
      %p175 = por %p173, %p174
      %p177 = scmp.ne.s32.totalorder %s160, %s176
      %p178 = scmp.eq.s32.totalorder %s32, 0
      %p179 = por %p177, %p178
      %s180 = ssub.s32 %s26, %s33
      %p181 = scmp.eq.s32.totalorder %s180, 0
      %s183 = sadd.s32 %s182, 1
      %s184 = scalar_select %p181, %s182, %s183
      %p187 = pneg %p181
      %p188 = scmp.eq.s32.totalorder %s26, 1
      %p189 = por %p187, %p188
      %p190 = scmp.ne.s32.totalorder %s182, %s185
      %p191 = scmp.eq.s32.totalorder %s26, 0
      %p192 = por %p190, %p191
      %p193 = scmp.ne.s32.totalorder %s182, %s185
      %p194 = scmp.eq.s32.totalorder %s31, 1
      %p195 = por %p193, %p194
      %p196 = scmp.ne.s32.totalorder %s185, %s186
      %p197 = scmp.eq.s32.totalorder %s31, 0
      %p198 = por %p196, %p197
      %p199 = scmp.ne.s32.totalorder %s185, %s186
      %p200 = scmp.eq.s32.totalorder %s32, 1
      %p201 = por %p199, %p200
      %p203 = scmp.ne.s32.totalorder %s186, %s202
      %p204 = scmp.eq.s32.totalorder %s32, 0
      %p205 = por %p203, %p204
      %p206 = scmp.le.s32.totalorder 1, %s26
      %p207 = scmp.lt.s32.totalorder %s26, 3
      %p208 = pnand %p206, %p207
      %p209 = pneg %p208
      // Predicated region
      $region9: #{tpu_custom_call.1} parent=5 // pred_check
        _
      $region10: #{tpu_custom_call.1} parent=5 // pred_check_branch
        %211 = sbr.rel (%p208) target = $region12
      $region11: #{tpu_custom_call.1} parent=5 // pred_region
        %s212 = ssub.s32 %s26, 1
        // Predicated region
        $region13: #{tpu_custom_call.1} parent=11 // pred_check
          %p213 = pneg %p73
        $region14: #{tpu_custom_call.1} parent=11 // pred_check_branch
          %215 = sbr.rel (%p213) target = $region16
        $region15: #{tpu_custom_call.1} parent=11 // pred_region
          %217 = vsyncadd [#allocation6], 0
          %s218 = sshll.u32 %s1, 4
          %s219 = int_to_ptr.hbm [resolvable:$true] %s218
          %s220 = sshll.u32 [#allocation5], 4
          %s221 = int_to_ptr.vmem [resolvable:$true] %s220
          %226 = dma.hbm_to_vmem [thread:$0]  %s219, 1024, %s221, [#allocation6], 256, 256, 16
        $region16: #{tpu_custom_call.1} parent=11 // pred_fallthru
          _
        // Predicated region
        $region17: #{tpu_custom_call.1} parent=11 // pred_check
          %p227 = pneg %p94
        $region18: #{tpu_custom_call.1} parent=11 // pred_check_branch
          %229 = sbr.rel (%p227) target = $region20
        $region19: #{tpu_custom_call.1} parent=11 // pred_region
          %231 = vsyncadd [#allocation6], 0
          %s233 = sshll.u32 %s2, 4
          %s234 = int_to_ptr.hbm [resolvable:$true] %s233
          %s235 = sshll.u32 [#allocation7], 4
          %s236 = int_to_ptr.vmem [resolvable:$true] %s235
          %238 = dma.hbm_to_vmem [thread:$0]  %s234, 32, %s236, [#allocation6]
        $region20: #{tpu_custom_call.1} parent=11 // pred_fallthru
          _
      $region12: #{tpu_custom_call.1} parent=5 // pred_fallthru
        _
      %p239 = scmp.lt.s32.totalorder %s26, 2
      // Predicated region
      $region21: #{tpu_custom_call.1} parent=5 // pred_check
        %p240 = pneg %p239
      $region22: #{tpu_custom_call.1} parent=5 // pred_check_branch
        %242 = sbr.rel (%p240) target = $region24
      $region23: #{tpu_custom_call.1} parent=5 // pred_region
        // Predicated region
        $region25: #{tpu_custom_call.1} parent=23 // pred_check
          %p243 = pneg %p46
        $region26: #{tpu_custom_call.1} parent=23 // pred_check_branch
          %245 = sbr.rel (%p243) target = $region28
        $region27: #{tpu_custom_call.1} parent=23 // pred_region
          %s246 = sand.u32 %s36, 1
          %s247 = scalar_lea.sflag [#allocation3], %s246
          %s248 = sand.u32 %s36, 1
          %s249 = smul.addr %s248, 8
          %s250 = scalar_lea.vmem [#allocation2], %s249
          %252 = vsyncadd %s247, 0
          %s253 = smul.addr %s26, 8
          %s254 = scalar_lea.hbm %s0, %s253
          %s256 = sshll.u32 %s254, 4
          %s257 = int_to_ptr.hbm [resolvable:$true] %s256
          %s258 = sshll.u32 %s250, 4
          %s259 = int_to_ptr.vmem [resolvable:$true] %s258
          %261 = dma.hbm_to_vmem [thread:$0]  %s257, 128, %s259, %s247
        $region28: #{tpu_custom_call.1} parent=23 // pred_fallthru
          _
        // Predicated region
        $region29: #{tpu_custom_call.1} parent=23 // pred_check
          %p262 = pneg %p114
        $region30: #{tpu_custom_call.1} parent=23 // pred_check_branch
          %264 = sbr.rel (%p262) target = $region32
        $region31: #{tpu_custom_call.1} parent=23 // pred_region
          %s265 = sand.u32 %s104, 1
          %s266 = scalar_lea.sflag [#allocation9], %s265
          %s267 = sand.u32 %s104, 1
          %s268 = smul.addr %s267, 8
          %s269 = scalar_lea.vmem [#allocation8], %s268
          %271 = vsyncadd %s266, 0
          %s272 = smul.addr %s26, 8
          %s273 = scalar_lea.hbm %s3, %s272
          %s275 = sshll.u32 %s273, 4
          %s276 = int_to_ptr.hbm [resolvable:$true] %s275
          %s277 = sshll.u32 %s269, 4
          %s278 = int_to_ptr.vmem [resolvable:$true] %s277
          %280 = dma.hbm_to_vmem [thread:$0]  %s276, 128, %s278, %s266
        $region32: #{tpu_custom_call.1} parent=23 // pred_fallthru
          _
      $region24: #{tpu_custom_call.1} parent=5 // pred_fallthru
        _
      %p281 = scmp.le.s32.totalorder 1, %s26
      %p282 = scmp.lt.s32.totalorder %s26, 3
      %p283 = pnand %p281, %p282
      %p284 = pneg %p283
      // Predicated region
      $region33: #{tpu_custom_call.1} parent=5 // pred_check
        _
      $region34: #{tpu_custom_call.1} parent=5 // pred_check_branch
        %286 = sbr.rel (%p283) target = $region36
      $region35: #{tpu_custom_call.1} parent=5 // pred_region
        %s287 = ssub.s32 %s26, 1
        %s288 = sand.u32 %s39, 1
        %s289 = scalar_lea.sflag [#allocation3], %s288
        %s290 = sand.u32 %s39, 1
        %s291 = smul.addr %s290, 8
        %s292 = scalar_lea.vmem [#allocation2], %s291
        // Predicated region
        $region37: #{tpu_custom_call.1} parent=35 // pred_check
          %p293 = pneg %p52
        $region38: #{tpu_custom_call.1} parent=35 // pred_check_branch
          %295 = sbr.rel (%p293) target = $region40
        $region39: #{tpu_custom_call.1} parent=35 // pred_region
          %297 = dma.done %s289, 128
        $region40: #{tpu_custom_call.1} parent=35 // pred_fallthru
          _
        // Predicated region
        $region41: #{tpu_custom_call.1} parent=35 // pred_check
          %p298 = pneg %p73
        $region42: #{tpu_custom_call.1} parent=35 // pred_check_branch
          %300 = sbr.rel (%p298) target = $region44
        $region43: #{tpu_custom_call.1} parent=35 // pred_region
          %302 = dma.done [#allocation6], 1024
        $region44: #{tpu_custom_call.1} parent=35 // pred_fallthru
          _
        // Predicated region
        $region45: #{tpu_custom_call.1} parent=35 // pred_check
          %p303 = pneg %p94
        $region46: #{tpu_custom_call.1} parent=35 // pred_check_branch
          %305 = sbr.rel (%p303) target = $region48
        $region47: #{tpu_custom_call.1} parent=35 // pred_region
          %307 = dma.done [#allocation6], 32
        $region48: #{tpu_custom_call.1} parent=35 // pred_fallthru
          _
        %s308 = sand.u32 %s107, 1
        %s309 = scalar_lea.sflag [#allocation9], %s308
        %s310 = sand.u32 %s107, 1
        %s311 = smul.addr %s310, 8
        %s312 = scalar_lea.vmem [#allocation8], %s311
        // Predicated region
        $region49: #{tpu_custom_call.1} parent=35 // pred_check
          %p313 = pneg %p120
        $region50: #{tpu_custom_call.1} parent=35 // pred_check_branch
          %315 = sbr.rel (%p313) target = $region52
        $region51: #{tpu_custom_call.1} parent=35 // pred_region
          %317 = dma.done %s309, 128
        $region52: #{tpu_custom_call.1} parent=35 // pred_fallthru
          _
        %s318 = sand.u32 %s39, 1
        %s319 = scalar_lea.sflag [#allocation3], %s318
        %s320 = sand.u32 %s39, 1
        %s321 = smul.addr %s320, 8
        %s322 = scalar_lea.vmem [#allocation2], %s321
        %p323 = pneg %p52
        %p324 = pneg %p49
        %p325 = pneg %p73
        %p326 = pneg %p70
        %p327 = pneg %p94
        %p328 = pneg %p91
        %s329 = sand.u32 %s107, 1
        %s330 = scalar_lea.sflag [#allocation9], %s329
        %s331 = sand.u32 %s107, 1
        %s332 = smul.addr %s331, 8
        %s333 = scalar_lea.vmem [#allocation8], %s332
        %p334 = pneg %p120
        %p335 = pneg %p117
        %p336 = pneg %p146
        %p337 = pneg %p143
        %s338 = sand.u32 %s133, 1
        %s339 = scalar_lea.sflag [#allocation4], %s338
        %s340 = sand.u32 %s133, 1
        %s341 = smul.addr %s340, 8
        %s342 = scalar_lea.vmem [#allocation10], %s341
        %p343 = pneg %p172
        %p344 = pneg %p169
        %s345 = sand.u32 %s31, 1
        %s346 = scalar_lea.sflag [#allocation12], %s345
        %s347 = sand.u32 %s159, 1
        %s348 = smul.addr %s347, 8
        %s349 = scalar_lea.vmem [#allocation11], %s348
        %p350 = pneg %p198
        %p351 = pneg %p195
        %s352 = sand.u32 %s31, 1
        %s353 = scalar_lea.sflag [#allocation12], %s352
        %s354 = sand.u32 %s185, 1
        %s355 = smul.addr %s354, 8
        %s356 = scalar_lea.vmem [#allocation13], %s355
        %v357 = vld [vmem:[%s292] sm:$0xff]
        %v358 = vld [vmem:[#allocation5] sm:$0xff]
        %v359 = vld [vmem:[#allocation5 + $0x8] sm:$0xff]
        %v360 = vld [vmem:[#allocation5 + $0x10] sm:$0xff]
        %v361 = vld [vmem:[#allocation5 + $0x18] sm:$0xff]
        %v362 = vld [vmem:[#allocation5 + $0x20] sm:$0xff]
        %v363 = vld [vmem:[#allocation5 + $0x28] sm:$0xff]
        %v364 = vld [vmem:[#allocation5 + $0x30] sm:$0xff]
        %v365 = vld [vmem:[#allocation5 + $0x38] sm:$0xff]
        %v366 = vld [vmem:[#allocation7] sm:$0x3]
        %v368 = vperm.slane %v366, 0
        %v369 = vperm.slane %v366, 1
        %vm372 = vcmask 261120
        %v374 = vsel %vm372, %v357, 0
        %376 = vmatpush.msra.mxu0 0.0
        %377 = vmatpush.msra.mxu0 0.0
        %378 = vmatpush.msra.mxu0 0.0
        %379 = vmatpush.msra.mxu0 0.0
        %380 = vmatpush.msra.mxu0 0.0
        %381 = vmatpush.msra.mxu0 0.0
        %382 = vmatpush.msra.mxu0 0.0
        %383 = vmatpush.msra.mxu0 0.0
        %384 = vmatpush.msra.mxu0 0.0
        %385 = vmatpush.msra.mxu0 0.0
        %386 = vmatpush.msra.mxu0 0.0
        %387 = vmatpush.msra.mxu0 0.0
        %388 = vmatpush.msra.mxu0 %v364
        %389 = vmatpush.msra.mxu0 %v362
        %390 = vmatpush.msra.mxu0 %v360
        %391 = vmatpush.msra.mxu0 %v358
        %392 = vmatmul.f32.gmra.mxu0 %v374
        %v393 = vpop.f32.mrf.mxu0
        %v394 = vadd.f32 %v368, %v393
        %395 = vdwg.mxu0
        %396 = vmatpush.msra.mxu0 0.0
        %397 = vmatpush.msra.mxu0 0.0
        %398 = vmatpush.msra.mxu0 0.0
        %399 = vmatpush.msra.mxu0 0.0
        %400 = vmatpush.msra.mxu0 0.0
        %401 = vmatpush.msra.mxu0 0.0
        %402 = vmatpush.msra.mxu0 0.0
        %403 = vmatpush.msra.mxu0 0.0
        %404 = vmatpush.msra.mxu0 0.0
        %405 = vmatpush.msra.mxu0 0.0
        %406 = vmatpush.msra.mxu0 0.0
        %407 = vmatpush.msra.mxu0 0.0
        %408 = vmatpush.msra.mxu0 %v365
        %409 = vmatpush.msra.mxu0 %v363
        %410 = vmatpush.msra.mxu0 %v361
        %411 = vmatpush.msra.mxu0 %v359
        %412 = vmatmul.f32.gmra.mxu0 %v374
        %v413 = vpop.f32.mrf.mxu0
        %v414 = vadd.f32 %v369, %v413
        %415 = vdwg.mxu0
        %v416 = vmul.f32 %v414, 0.5
        %v417 = vmul.f32 %v416, 1.442695
        %v418 = vpow.pop %v417
        %v419 = vld [vmem:[%s312] sm:$0xff]
        %v420 = vmul.f32 %v419, %v418
        %v421 = vadd.f32 %v420, %v394
        %422 = vst [vmem:[%s342] sm:$0xff] %v421
        %423 = vst [vmem:[%s349] sm:$0xff] %v394
        %424 = vst [vmem:[%s356] sm:$0xff] %v414
        %s425 = sand.u32 %s133, 1
        %s426 = scalar_lea.sflag [#allocation4], %s425
        %s427 = sand.u32 %s133, 1
        %s428 = smul.addr %s427, 8
        %s429 = scalar_lea.vmem [#allocation10], %s428
        %s430 = sand.u32 %s31, 1
        %s431 = scalar_lea.sflag [#allocation12], %s430
        %s432 = sand.u32 %s159, 1
        %s433 = smul.addr %s432, 8
        %s434 = scalar_lea.vmem [#allocation11], %s433
        %s435 = sand.u32 %s31, 1
        %s436 = scalar_lea.sflag [#allocation12], %s435
        %s437 = sand.u32 %s185, 1
        %s438 = smul.addr %s437, 8
        %s439 = scalar_lea.vmem [#allocation13], %s438
        // Predicated region
        $region53: #{tpu_custom_call.1} parent=35 // pred_check
          %p440 = pneg %p143
        $region54: #{tpu_custom_call.1} parent=35 // pred_check_branch
          %442 = sbr.rel (%p440) target = $region56
        $region55: #{tpu_custom_call.1} parent=35 // pred_region
          %444 = vsyncadd %s426, 0
          %s445 = smul.addr %s31, 8
          %s446 = scalar_lea.hbm %s4, %s445
          %s448 = sshll.u32 %s429, 4
          %s449 = int_to_ptr.vmem [resolvable:$true] %s448
          %s450 = sshll.u32 %s446, 4
          %s451 = int_to_ptr.hbm [resolvable:$true] %s450
          %453 = dma.vmem_to_hbm [thread:$0]  %s449, 128, %s451, %s426
        $region56: #{tpu_custom_call.1} parent=35 // pred_fallthru
          _
        // Predicated region
        $region57: #{tpu_custom_call.1} parent=35 // pred_check
          %p454 = pneg %p169
        $region58: #{tpu_custom_call.1} parent=35 // pred_check_branch
          %456 = sbr.rel (%p454) target = $region60
        $region59: #{tpu_custom_call.1} parent=35 // pred_region
          %458 = vsyncadd %s431, 0
          %s459 = smul.addr %s31, 8
          %s460 = scalar_lea.hbm %s5, %s459
          %s462 = sshll.u32 %s434, 4
          %s463 = int_to_ptr.vmem [resolvable:$true] %s462
          %s464 = sshll.u32 %s460, 4
          %s465 = int_to_ptr.hbm [resolvable:$true] %s464
          %467 = dma.vmem_to_hbm [thread:$0]  %s463, 128, %s465, %s431
        $region60: #{tpu_custom_call.1} parent=35 // pred_fallthru
          _
        // Predicated region
        $region61: #{tpu_custom_call.1} parent=35 // pred_check
          %p468 = pneg %p195
        $region62: #{tpu_custom_call.1} parent=35 // pred_check_branch
          %470 = sbr.rel (%p468) target = $region64
        $region63: #{tpu_custom_call.1} parent=35 // pred_region
          %472 = vsyncadd %s436, 0
          %s473 = smul.addr %s31, 8
          %s474 = scalar_lea.hbm %s6, %s473
          %s476 = sshll.u32 %s439, 4
          %s477 = int_to_ptr.vmem [resolvable:$true] %s476
          %s478 = sshll.u32 %s474, 4
          %s479 = int_to_ptr.hbm [resolvable:$true] %s478
          %481 = dma.vmem_to_hbm [thread:$0]  %s477, 128, %s479, %s436
        $region64: #{tpu_custom_call.1} parent=35 // pred_fallthru
          _
      $region36: #{tpu_custom_call.1} parent=5 // pred_fallthru
        _
      %p482 = scmp.le.s32.totalorder 2, %s26
      // Predicated region
      $region65: #{tpu_custom_call.1} parent=5 // pred_check
        %p483 = pneg %p482
      $region66: #{tpu_custom_call.1} parent=5 // pred_check_branch
        %485 = sbr.rel (%p483) target = $region68
      $region67: #{tpu_custom_call.1} parent=5 // pred_region
        %s486 = ssub.s32 %s26, 2
        // Predicated region
        $region69: #{tpu_custom_call.1} parent=67 // pred_check
          %p487 = pneg %p149
        $region70: #{tpu_custom_call.1} parent=67 // pred_check_branch
          %489 = sbr.rel (%p487) target = $region72
        $region71: #{tpu_custom_call.1} parent=67 // pred_region
          %s490 = sand.u32 %s134, 1
          %s491 = scalar_lea.sflag [#allocation4], %s490
          %s492 = sand.u32 %s134, 1
          %s493 = smul.addr %s492, 8
          %s494 = scalar_lea.vmem [#allocation10], %s493
          %496 = dma.done %s491, 128
        $region72: #{tpu_custom_call.1} parent=67 // pred_fallthru
          _
        // Predicated region
        $region73: #{tpu_custom_call.1} parent=67 // pred_check
          %p497 = pneg %p175
        $region74: #{tpu_custom_call.1} parent=67 // pred_check_branch
          %499 = sbr.rel (%p497) target = $region76
        $region75: #{tpu_custom_call.1} parent=67 // pred_region
          %s500 = sand.u32 %s32, 1
          %s501 = scalar_lea.sflag [#allocation12], %s500
          %s502 = sand.u32 %s160, 1
          %s503 = smul.addr %s502, 8
          %s504 = scalar_lea.vmem [#allocation11], %s503
          %506 = dma.done %s501, 128
        $region76: #{tpu_custom_call.1} parent=67 // pred_fallthru
          _
        // Predicated region
        $region77: #{tpu_custom_call.1} parent=67 // pred_check
          %p507 = pneg %p201
        $region78: #{tpu_custom_call.1} parent=67 // pred_check_branch
          %509 = sbr.rel (%p507) target = $region80
        $region79: #{tpu_custom_call.1} parent=67 // pred_region
          %s510 = sand.u32 %s32, 1
          %s511 = scalar_lea.sflag [#allocation12], %s510
          %s512 = sand.u32 %s186, 1
          %s513 = smul.addr %s512, 8
          %s514 = scalar_lea.vmem [#allocation13], %s513
          %516 = dma.done %s511, 128
        $region80: #{tpu_custom_call.1} parent=67 // pred_fallthru
          _
      $region68: #{tpu_custom_call.1} parent=5 // pred_fallthru
        _
    $region6: #{tpu_custom_call.1} parent=1 // loop_footer
      %s30 = sadd.s32 1, %s26
    $region7: #{tpu_custom_call.1} parent=1 // loop_footer_branch
      %25 = sbr.rel target = $region3
    $region8: #{tpu_custom_call.1} parent=1 // loop_exit
      _
    %517 = vsyncpa [#allocation3], 1
    %s518 = scalar_lea.sflag [#allocation3], 1
    %519 = vsyncpa %s518, 1
    %520 = vsyncpa [#allocation6], 1
    %521 = vsyncpa [#allocation9], 1
    %s522 = scalar_lea.sflag [#allocation9], 1
    %523 = vsyncpa %s522, 1
    %524 = vsyncpa [#allocation4], 1
    %s525 = scalar_lea.sflag [#allocation4], 1
    %526 = vsyncpa %s525, 1
    %527 = vsyncpa [#allocation12], 1
    %s528 = scalar_lea.sflag [#allocation12], 1
    %529 = vsyncpa %s528, 1

</llo_original>
